<compile_context>
chip_gen: v5e
topology: v5e:2x2
jax: 0.10.0
libtpu: 0.0.40
codegen_flags: <defaults>
</compile_context>

<pallas_src>
import jax
import jax.numpy as jnp
from jax.experimental import pallas as pl
from jax.experimental.pallas import tpu as pltpu


_MAX_TILE_BYTES = 32 * 1024 * 1024   # per x buffer; diminishing returns beyond


def _make_kernel(s_total, tile_s, tiles_per_split, num_tiles, inv_count, needs_mask):
    """Pooling-sum + fused batch-fold/linear kernel.

    Refs:
      x_ref : (R, tile_s)    f32   R = N*C rows, spatial tile in lanes
      w_ref : (R, hidden)    f32   weight.T replicated over the batch
      b_ref : (1, hidden)    f32
      o_ref : (1, 1, hidden) f32   per-split partial linear output
      acc_ref, comp_ref : (R, 1) f32 accumulator + Kahan compensation
    """

    def kernel(x_ref, w_ref, b_ref, o_ref, acc_ref, comp_ref):
        p = pl.program_id(0)                    # split (TensorCore) index
        s = pl.program_id(1)                    # spatial tile index within split

        @pl.when(s == 0)
        def _init():
            acc_ref[...] = jnp.zeros_like(acc_ref)
            comp_ref[...] = jnp.zeros_like(comp_ref)

        xv = x_ref[...]                         # (R, tile_s)
        gtile = p * tiles_per_split + s         # global tile index along S

        def _accumulate(part):
            # Kahan-compensated sum of per-tile partials; operates on (R, 1)
            # vectors only, so the cost is negligible next to the tile reduce.
            y = part - comp_ref[...]
            t = acc_ref[...] + y
            comp_ref[...] = (t - acc_ref[...]) - y
            acc_ref[...] = t

        if needs_mask:
            # Only the edge tile(s) of the global spatial range can be ragged
            # (or fully out of range when an odd tile count is split in two).
            # Gate the iota/compare/select off the interior fast path.
            is_edge = gtile >= (num_tiles - 1)

            @pl.when(jnp.logical_not(is_edge))
            def _interior():
                _accumulate(jnp.sum(xv, axis=-1, keepdims=True))

            @pl.when(is_edge)
            def _edge():
                lane = jax.lax.broadcasted_iota(jnp.int32, xv.shape, 1)
                valid = (gtile * tile_s + lane) < s_total
                _accumulate(jnp.sum(jnp.where(valid, xv, 0.0),
                                    axis=-1, keepdims=True))
        else:
            _accumulate(jnp.sum(xv, axis=-1, keepdims=True))

        @pl.when(s == pl.num_programs(1) - 1)
        def _finalize():
            # out[h] = sum_{n,c} W[h, c] * pooled-contribution of row (n, c).
            # w_ref already holds W[h, row % C] transposed, so the batch fold
            # and the C->hidden linear are one VPU multiply + sublane reduce.
            partial = acc_ref[...] * inv_count                          # (R, 1)
            lin = jnp.sum(w_ref[...] * partial, axis=0, keepdims=True)  # (1, hidden)
            lin = lin + b_ref[...] * (p == 0).astype(lin.dtype)         # bias once
            o_ref[0] = lin

    return kernel


def _vmem_limit_bytes():
    # Generation-aware scoped-VMEM limit: 3/4 of physical per-core VMEM
    # (v5e/v6e: 128 MiB -> 96 MiB; v7x: 64 MiB -> 48 MiB); conservative
    # fallback (v7x-sized) if the query is unavailable.
    try:
        cap = int(pltpu.get_tpu_info().vmem_capacity_bytes)
    except Exception:
        cap = 64 * 1024 * 1024
    return min((cap * 3) // 4, 96 * 1024 * 1024)


def basic_linear_forward(x, weight, bias):
    """x: (N, C, H, W) f32; weight: (hidden, C) f32; bias: (hidden,) -> (hidden,)."""
    N, C, H, W = x.shape
    hidden, c_w = weight.shape
    assert c_w == C
    S = H * W
    R = N * C

    # Free, contiguous reshapes only -- no wrapper-side HBM transpose of x.
    x2 = x.reshape(R, S)
    # Row j of x2 is channel j % C; replicate weight.T accordingly (tiny array;
    # lets the finalize fold batch + linear without any in-kernel relayout).
    w_rep = jnp.tile(weight.T, (N, 1))            # (R, hidden)
    b2 = bias.reshape(1, hidden)

    # --- VMEM accounting with the *padded* footprint -------------------------
    r_pad = -(-R // 8) * 8                        # f32 sublane padding
    h_pad = -(-hidden // 128) * 128               # lane padding
    lane_col_bytes = r_pad * 4                    # bytes per spatial lane of an x tile
    vmem_limit = _vmem_limit_bytes()
    fixed = (2 * r_pad * 128 * 4                  # acc + comp scratch (lane-padded)
             + 2 * r_pad * h_pad * 4              # double-buffered replicated weight
             + 4 * 8 * h_pad * 4                  # bias + output blocks (padded)
             + (2 << 20))                         # slack for Mosaic internals
    x_budget = max(vmem_limit - fixed, 3 * 2 * 128 * lane_col_bytes)

    def cap_lanes(n_buf):
        per_buf = min(x_budget // (n_buf + 1), _MAX_TILE_BYTES)
        return max(128, (per_buf // lane_col_bytes) // 128 * 128)

    cap2 = cap_lanes(2)
    if S <= cap2:
        tile_s, n_buf = S, 2                      # single full-extent tile per step
    elif cap2 >= 512:
        tile_s, n_buf = cap2, 2
    else:
        # Many rows force small lane tiles (short strided DMAs): deepen the x
        # pipeline to 3 buffers so the DMA latency stays hidden.
        tile_s, n_buf = cap_lanes(3), 3
    num_tiles = -(-S // tile_s)

    # Leading "parallel" axis: splits the HBM sweep across v7x's two
    # TensorCores; on single-core chips it simply iterates (negligible cost).
    num_splits = 2 if num_tiles >= 2 else 1
    tiles_per_split = -(-num_tiles // num_splits)
    has_dup = (num_splits * tiles_per_split) != num_tiles
    needs_mask = (S % tile_s != 0) or has_dup

    if has_dup:
        # Odd tile count: the padding step of split 1 re-reads the last real
        # tile (in-bounds DMA); the in-kernel mask zeroes its contribution.
        def x_index(p, s):
            return (0, jnp.minimum(p * tiles_per_split + s, num_tiles - 1))
    else:
        def x_index(p, s):
            return (0, p * tiles_per_split + s)

    if n_buf == 3:
        x_spec = pl.BlockSpec((R, tile_s), x_index, pipeline_mode=pl.Buffered(3))
    else:
        x_spec = pl.BlockSpec((R, tile_s), x_index)

    kernel = _make_kernel(S, tile_s, tiles_per_split, num_tiles,
                          1.0 / float(N * S), needs_mask)

    partials = pl.pallas_call(
        kernel,
        out_shape=jax.ShapeDtypeStruct((num_splits, 1, hidden), jnp.float32),
        grid_spec=pltpu.PrefetchScalarGridSpec(
            num_scalar_prefetch=0,
            grid=(num_splits, tiles_per_split),
            in_specs=[
                x_spec,
                pl.BlockSpec((R, hidden), lambda p, s: (0, 0)),
                pl.BlockSpec((1, hidden), lambda p, s: (0, 0)),
            ],
            out_specs=pl.BlockSpec((1, 1, hidden), lambda p, s: (p, 0, 0)),
            scratch_shapes=[pltpu.VMEM((R, 1), jnp.float32),
                            pltpu.VMEM((R, 1), jnp.float32)],
        ),
        compiler_params=pltpu.CompilerParams(
            dimension_semantics=("parallel", "arbitrary"),
            vmem_limit_bytes=vmem_limit,
        ),
    )(x2, w_rep, b2)

    # Combine per-split partial linear outputs (bias was added once, in split 0).
    # O(num_splits * hidden) -- negligible.
    return jnp.sum(partials, axis=(0, 1))


if __name__ == "__main__":
    # Module config: num_input (= channel dim C) and hidden_size.
    num_input = 4
    hidden_size = 8

    key = jax.random.PRNGKey(0)
    k_x, k_w, k_b = jax.random.split(key, 3)

    # Input: NCHW, C must equal num_input.
    x = jax.random.normal(k_x, (2, num_input, 16, 16), dtype=jnp.float32)

    # Deterministic nn.Linear-style init: U(-1/sqrt(fan_in), 1/sqrt(fan_in)).
    bound = 1.0 / (num_input ** 0.5)
    weight = jax.random.uniform(k_w, (hidden_size, num_input),
                                minval=-bound, maxval=bound, dtype=jnp.float32)
    bias = jax.random.uniform(k_b, (hidden_size,),
                              minval=-bound, maxval=bound, dtype=jnp.float32)

    out = basic_linear_forward(x, weight, bias)
    out = jax.block_until_ready(out)

    # Sanity check against a pure-JAX reference of the PyTorch forward.
    pooled_ref = jnp.mean(x, axis=(0, 2, 3))          # (C,) mean over N, H, W
    ref = pooled_ref @ weight.T + bias                # (hidden,)
    assert out.shape == (hidden_size,)
    assert jnp.allclose(out, ref, atol=1e-5, rtol=1e-5)

    print("KERNEL_OK")
</pallas_src>

<mosaic_0001>
module attributes {stable_mosaic.version = 11 : i64} {
  func.func @kernel(%arg0: i32, %arg1: i32, %arg2: memref<8x256xf32, #tpu.memory_space<vmem>>, %arg3: memref<8x8xf32, #tpu.memory_space<vmem>>, %arg4: memref<1x8xf32, #tpu.memory_space<vmem>>, %arg5: memref<1x1x8xf32, #tpu.memory_space<vmem>>, %arg6: memref<8x1xf32, #tpu.memory_space<vmem>>, %arg7: memref<8x1xf32, #tpu.memory_space<vmem>>) attributes {dimension_semantics = [#tpu.dimension_semantics<parallel>, #tpu.dimension_semantics<arbitrary>], iteration_bounds = array<i64: 1, 1>, scalar_prefetch = 0 : i64, scratch_operands = 2 : i64, tpu.core_type = #tpu.core_type<tc>, window_params = [{transform_indices = @transform_0, window_bounds = array<i64: 8, 256>}, {pipeline_mode = #tpu.pipeline_mode<synchronous>, transform_indices = @transform_1, window_bounds = array<i64: 8, 8>}, {pipeline_mode = #tpu.pipeline_mode<synchronous>, transform_indices = @transform_2, window_bounds = array<i64: 1, 8>}, {transform_indices = @transform_3, window_bounds = array<i64: 1, 1, 8>}]} {
    %c0_i32 = arith.constant 0 : i32
    %0 = arith.cmpi eq, %arg1, %c0_i32 : i32
    %1 = arith.extui %0 : i1 to i32
    %c0_i32_0 = arith.constant 0 : i32
    %2 = arith.cmpi ne, %1, %c0_i32_0 : i32
    scf.if %2 {
      %cst_14 = arith.constant 0.000000e+00 : f32
      %18 = vector.broadcast %cst_14 : f32 to vector<8x1xf32>
      %c0_15 = arith.constant 0 : index
      %c0_16 = arith.constant 0 : index
      %19 = vector.load %arg6[%c0_15, %c0_16] : memref<8x1xf32, #tpu.memory_space<vmem>>, vector<8x1xf32>
      tpu.vector_store %arg6[%c0_15, %c0_16], %18 {strides = array<i32>} : memref<8x1xf32, #tpu.memory_space<vmem>>, vector<8x1xf32>,
      %cst_17 = arith.constant 0.000000e+00 : f32
      %20 = vector.broadcast %cst_17 : f32 to vector<8x1xf32>
      %c0_18 = arith.constant 0 : index
      %c0_19 = arith.constant 0 : index
      %21 = vector.load %arg7[%c0_18, %c0_19] : memref<8x1xf32, #tpu.memory_space<vmem>>, vector<8x1xf32>
      tpu.vector_store %arg7[%c0_18, %c0_19], %20 {strides = array<i32>} : memref<8x1xf32, #tpu.memory_space<vmem>>, vector<8x1xf32>,
    } else {
    }
    %c0 = arith.constant 0 : index
    %c0_1 = arith.constant 0 : index
    %3 = vector.load %arg2[%c0, %c0_1] : memref<8x256xf32, #tpu.memory_space<vmem>>, vector<8x256xf32>
    %cst = arith.constant dense<0.000000e+00> : vector<8xf32>
    %4 = vector.multi_reduction <add>, %3, %cst [1] : vector<8x256xf32> to vector<8xf32>
    %5 = vector.shape_cast %4 : vector<8xf32> to vector<8x1xf32>
    %c0_2 = arith.constant 0 : index
    %c0_3 = arith.constant 0 : index
    %6 = vector.load %arg7[%c0_2, %c0_3] : memref<8x1xf32, #tpu.memory_space<vmem>>, vector<8x1xf32>
    %7 = arith.subf %5, %6 : vector<8x1xf32>
    %c0_4 = arith.constant 0 : index
    %c0_5 = arith.constant 0 : index
    %8 = vector.load %arg6[%c0_4, %c0_5] : memref<8x1xf32, #tpu.memory_space<vmem>>, vector<8x1xf32>
    %9 = arith.addf %8, %7 : vector<8x1xf32>
    %c0_6 = arith.constant 0 : index
    %c0_7 = arith.constant 0 : index
    %10 = vector.load %arg6[%c0_6, %c0_7] : memref<8x1xf32, #tpu.memory_space<vmem>>, vector<8x1xf32>
    %11 = arith.subf %9, %10 : vector<8x1xf32>
    %12 = arith.subf %11, %7 : vector<8x1xf32>
    %c0_8 = arith.constant 0 : index
    %c0_9 = arith.constant 0 : index
    %13 = vector.load %arg7[%c0_8, %c0_9] : memref<8x1xf32, #tpu.memory_space<vmem>>, vector<8x1xf32>
    tpu.vector_store %arg7[%c0_8, %c0_9], %12 {strides = array<i32>} : memref<8x1xf32, #tpu.memory_space<vmem>>, vector<8x1xf32>,
    %c0_10 = arith.constant 0 : index
    %c0_11 = arith.constant 0 : index
    %14 = vector.load %arg6[%c0_10, %c0_11] : memref<8x1xf32, #tpu.memory_space<vmem>>, vector<8x1xf32>
    tpu.vector_store %arg6[%c0_10, %c0_11], %9 {strides = array<i32>} : memref<8x1xf32, #tpu.memory_space<vmem>>, vector<8x1xf32>,
    %c0_i32_12 = arith.constant 0 : i32
    %15 = arith.cmpi eq, %arg1, %c0_i32_12 : i32
    %16 = arith.extui %15 : i1 to i32
    %c0_i32_13 = arith.constant 0 : i32
    %17 = arith.cmpi ne, %16, %c0_i32_13 : i32
    scf.if %17 {
      %c0_14 = arith.constant 0 : index
      %c0_15 = arith.constant 0 : index
      %18 = vector.load %arg6[%c0_14, %c0_15] : memref<8x1xf32, #tpu.memory_space<vmem>>, vector<8x1xf32>
      %cst_16 = arith.constant 0.001953125 : f32
      %19 = vector.broadcast %cst_16 : f32 to vector<8x1xf32>
      %20 = arith.mulf %18, %19 : vector<8x1xf32>
      %c0_17 = arith.constant 0 : index
      %c0_18 = arith.constant 0 : index
      %21 = vector.load %arg3[%c0_17, %c0_18] : memref<8x8xf32, #tpu.memory_space<vmem>>, vector<8x8xf32>
      %22 = vector.broadcast %20 : vector<8x1xf32> to vector<8x8xf32>
      %23 = arith.mulf %21, %22 : vector<8x8xf32>
      %cst_19 = arith.constant dense<0.000000e+00> : vector<8xf32>
      %24 = vector.multi_reduction <add>, %23, %cst_19 [0] : vector<8x8xf32> to vector<8xf32>
      %25 = vector.shape_cast %24 : vector<8xf32> to vector<1x8xf32>
      %c0_20 = arith.constant 0 : index
      %c0_21 = arith.constant 0 : index
      %26 = vector.load %arg4[%c0_20, %c0_21] : memref<1x8xf32, #tpu.memory_space<vmem>>, vector<1x8xf32>
      %c0_i32_22 = arith.constant 0 : i32
      %27 = arith.cmpi eq, %arg0, %c0_i32_22 : i32
      %28 = arith.extui %27 : i1 to i32
      %29 = arith.sitofp %28 : i32 to f32
      %30 = vector.broadcast %29 : f32 to vector<1x8xf32>
      %31 = arith.mulf %26, %30 : vector<1x8xf32>
      %32 = arith.addf %25, %31 : vector<1x8xf32>
      %c0_23 = arith.constant 0 : index
      %c0_24 = arith.constant 0 : index
      %c0_25 = arith.constant 0 : index
      %33 = vector.load %arg5[%c0_23, %c0_24, %c0_25] : memref<1x1x8xf32, #tpu.memory_space<vmem>>, vector<1x1x8xf32>
      %34 = vector.shape_cast %33 : vector<1x1x8xf32> to vector<1x8xf32>
      %35 = vector.shape_cast %32 : vector<1x8xf32> to vector<1x1x8xf32>
      tpu.vector_store %arg5[%c0_23, %c0_24, %c0_25], %35 {strides = array<i32>} : memref<1x1x8xf32, #tpu.memory_space<vmem>>, vector<1x1x8xf32>,
    } else {
    }
    return
  }
  func.func @transform_0(%arg0: i32, %arg1: i32) -> (i32, i32) {
    %c1_i32 = arith.constant 1 : i32
    %0 = arith.muli %arg0, %c1_i32 : i32
    %1 = arith.addi %0, %arg1 : i32
    %c0_i32 = arith.constant 0 : i32
    %c0_i32_0 = arith.constant 0 : i32
    return %c0_i32, %1 : i32, i32
  }
  func.func @transform_1(%arg0: i32, %arg1: i32) -> (i32, i32) {
    %c0_i32 = arith.constant 0 : i32
    %c0_i32_0 = arith.constant 0 : i32
    %c0_i32_1 = arith.constant 0 : i32
    return %c0_i32, %c0_i32_0 : i32, i32
  }
  func.func @transform_2(%arg0: i32, %arg1: i32) -> (i32, i32) {
    %c0_i32 = arith.constant 0 : i32
    %c0_i32_0 = arith.constant 0 : i32
    %c0_i32_1 = arith.constant 0 : i32
    return %c0_i32, %c0_i32_0 : i32, i32
  }
  func.func @transform_3(%arg0: i32, %arg1: i32) -> (i32, i32, i32) {
    %c0_i32 = arith.constant 0 : i32
    %c0_i32_0 = arith.constant 0 : i32
    %c0_i32_1 = arith.constant 0 : i32
    return %arg0, %c0_i32, %c0_i32_0 : i32, i32, i32
  }
}

</mosaic_0001>

<llo_original>
// kernel: tpu_custom_call.1
$region0: #{tpu_custom_call.1}
  #allocation0 [shape = 'u32[]', space=smem, size = 0x4, offset = 0x4, fixed_abs, tag = 'smem constant byte address 0x4 - core index']
  #allocation1 [shape = 'u32[72,128]{1,0:T(1,128)}', space=vmem, size = 0x9000, scoped, tag = 'internal scratch']
  #allocation2 [shape = 'f32[8,1]{1,0:T(8,128)}', space=vmem, size = 0x1000, scoped, tag = 'scratch operand']
  #allocation3 [shape = 'f32[8,1]{1,0:T(8,128)}', space=vmem, size = 0x1000, scoped, tag = 'scratch operand']
  %s0 = inlined_call_operand.hbm [shape: f32[8,256], index: 0, kind: input, shape index: {}]
  %s1 = inlined_call_operand.hbm [shape: f32[8,8], index: 1, kind: input, shape index: {}]
  %s2 = inlined_call_operand.vmem [shape: f32[1,8], index: 2, kind: input, shape index: {}]
  %s3 = inlined_call_operand.hbm [shape: f32[1,1,8], index: 3, kind: output, shape index: {}]
  %s4 = sld [smem:[#allocation0]]
  $region38: #{tpu_custom_call.1} parent=0
    _
  %s6 = ssub.s32 1, %s4
  %s7 = scalar_select 0, %s6, %s4
  $region1: #{tpu_custom_call.1} parent=0
    #allocation4 [shape = 'u8[8192]{0}', space=vmem, size = 0x2000, scoped, tag = 'input window, operand 0, single buffered']
    #allocation5 [shape = 's32[1]{0}', space=sflag, size = 0x4, scoped, tag = 'scoped memory for tpu_custom_call.1']
    #allocation6 [shape = 's32[1]{0}', space=sflag, size = 0x4, scoped, tag = 'scoped memory for tpu_custom_call.1']
    #allocation7 [shape = 'u8[4096]{0}', space=vmem, size = 0x1000, scoped, tag = 'input window, operand 1, single buffered']
    #allocation8 [shape = 's32[1]{0}', space=sflag, size = 0x4, scoped, tag = 'scoped memory for tpu_custom_call.1']
    #allocation9 [shape = 'u8[512]{0}', space=vmem, size = 0x400, scoped, tag = 'output window, operand 0, single buffered']
    %8 = vsyncpa [#allocation5], 0
    %9 = vsyncpa [#allocation8], 0
    %10 = vsyncpa [#allocation6], 0
    // Predicated region
    $region2: #{tpu_custom_call.1} parent=1 // pred_check
      _
    $region3: #{tpu_custom_call.1} parent=1 // pred_check_branch
      %12 = sbr.rel (0) target = $region5
    $region4: #{tpu_custom_call.1} parent=1 // pred_region
      %s13 = sadd.s32 0, 0
      %s14 = smul.u32 2, %s13
      %16 = vsyncadd [#allocation5], 0
      %s17 = smul.addr %s14, 8
      %s18 = scalar_lea.hbm %s0, %s17
      %s20 = sshll.u32 %s18, 4
      %s21 = int_to_ptr.hbm [resolvable:$true] %s20
      %s22 = sshll.u32 [#allocation4], 4
      %s23 = int_to_ptr.vmem [resolvable:$true] %s22
      %25 = dma.hbm_to_vmem [thread:$0]  %s21, 256, %s23, [#allocation5]
    $region5: #{tpu_custom_call.1} parent=1 // pred_fallthru
      _
    // Predicated region
    $region6: #{tpu_custom_call.1} parent=1 // pred_check
      _
    $region7: #{tpu_custom_call.1} parent=1 // pred_check_branch
      %27 = sbr.rel (0) target = $region9
    $region8: #{tpu_custom_call.1} parent=1 // pred_region
      %29 = vsyncadd [#allocation8], 0
      %s31 = sshll.u32 %s1, 4
      %s32 = int_to_ptr.hbm [resolvable:$true] %s31
      %s33 = sshll.u32 [#allocation7], 4
      %s34 = int_to_ptr.vmem [resolvable:$true] %s33
      %36 = dma.hbm_to_vmem [thread:$0]  %s32, 128, %s34, [#allocation8]
    $region9: #{tpu_custom_call.1} parent=1 // pred_fallthru
      _
    // Predicated region
    $region10: #{tpu_custom_call.1} parent=1 // pred_check
      _
    $region11: #{tpu_custom_call.1} parent=1 // pred_check_branch
      %38 = sbr.rel (0) target = $region13
    $region12: #{tpu_custom_call.1} parent=1 // pred_region
      _
    $region13: #{tpu_custom_call.1} parent=1 // pred_fallthru
      _
    // Predicated region
    $region14: #{tpu_custom_call.1} parent=1 // pred_check
      _
    $region15: #{tpu_custom_call.1} parent=1 // pred_check_branch
      %40 = sbr.rel (0) target = $region17
    $region16: #{tpu_custom_call.1} parent=1 // pred_region
      %42 = dma.done [#allocation5], 256
    $region17: #{tpu_custom_call.1} parent=1 // pred_fallthru
      _
    // Predicated region
    $region18: #{tpu_custom_call.1} parent=1 // pred_check
      _
    $region19: #{tpu_custom_call.1} parent=1 // pred_check_branch
      %44 = sbr.rel (0) target = $region21
    $region20: #{tpu_custom_call.1} parent=1 // pred_region
      %46 = dma.done [#allocation8], 128
    $region21: #{tpu_custom_call.1} parent=1 // pred_fallthru
      _
    %s47 = sadd.s32 0, 0
    %s48 = smul.u32 2, %s47
    %p49 = scmp.eq.s32.totalorder 0, 0
    // Predicated region
    $region22: #{tpu_custom_call.1} parent=1 // pred_check
      %p50 = pneg %p49
    $region23: #{tpu_custom_call.1} parent=1 // pred_check_branch
      %52 = sbr.rel (%p50) target = $region25
    $region24: #{tpu_custom_call.1} parent=1 // pred_region
      %vm53 = vcmask 7168
      %54 = vst.msk [vmem:[#allocation2] sm:$0xff] %vm53, 0.0
      %55 = vst.msk [vmem:[#allocation3] sm:$0xff] %vm53, 0.0
    $region25: #{tpu_custom_call.1} parent=1 // pred_fallthru
      _
    %v56 = vld [vmem:[#allocation4] sm:$0xff]
    %v57 = vld [vmem:[#allocation4 + $0x8] sm:$0xff]
    %v58 = vadd.f32 %v56, %v57
    %59 = vadd.xlane.f32.xlu0 %v58
    %v60 = vpop.xlane.xlu0 %59
    %v61 = vld [vmem:[#allocation3] sm:$0xff]
    %v62 = vsub.f32 %v60, %v61
    %v63 = vld [vmem:[#allocation2] sm:$0xff]
    %v64 = vadd.f32 %v63, %v62
    %v65 = vsub.f32 %v64, %v63
    %v66 = vsub.f32 %v65, %v62
    %vm67 = vcmask 7168
    %68 = vst.msk [vmem:[#allocation3] sm:$0xff] %vm67, %v66
    %69 = vst.msk [vmem:[#allocation2] sm:$0xff] %vm67, %v64
    // Predicated region
    $region26: #{tpu_custom_call.1} parent=1 // pred_check
      %p70 = pneg %p49
    $region27: #{tpu_custom_call.1} parent=1 // pred_check_branch
      %72 = sbr.rel (%p70) target = $region29
    $region28: #{tpu_custom_call.1} parent=1 // pred_region
      %v73 = vld [vmem:[#allocation2] sm:$0xff]
      %v74 = vmul.f32 %v73, 0.001953125
      %v75 = vld [vmem:[#allocation7] sm:$0xff]
      %77 = vset.pattern.permute.xlu0 0
      %78 = vperm.xlu0 %77, %v74
      %v79 = vpop.permute.xlu0 %78
      %v81 = vmul.f32 %v75, %v79
      %vm82 = vcmask 64512
      %v83 = vsel %vm82, %v81, 0.0
      %v84 = vrot.slane %v83, 4
      %v85 = vadd.f32 %v83, %v84
      %v86 = vrot.slane %v85, 2
      %v87 = vadd.f32 %v85, %v86
      %v88 = vrot.slane %v87, 1
      %v89 = vadd.f32 %v87, %v88
      %v90 = vld [vmem:[%s2] sm:$0x1]
      %p91 = scmp.eq.s32.totalorder 0, 0
      %s92 = scalar_select %p91, 1, 0
      %s93 = scvt.s32.f32 %s92
      %v94 = vstv %s93
      %v95 = vmul.f32 %v90, %v94
      %v96 = vadd.f32 %v89, %v95
      %vm97 = vcmask 57344
      %98 = vst.msk [vmem:[#allocation9] sm:$0x1] %vm97, %v96
    $region29: #{tpu_custom_call.1} parent=1 // pred_fallthru
      _
    // Predicated region
    $region30: #{tpu_custom_call.1} parent=1 // pred_check
      _
    $region31: #{tpu_custom_call.1} parent=1 // pred_check_branch
      %100 = sbr.rel (0) target = $region33
    $region32: #{tpu_custom_call.1} parent=1 // pred_region
      %102 = vsyncadd [#allocation6], 0
      %s104 = sshll.u32 [#allocation9], 4
      %s105 = int_to_ptr.vmem [resolvable:$true] %s104
      %s106 = sshll.u32 %s3, 4
      %s107 = int_to_ptr.hbm [resolvable:$true] %s106
      %109 = dma.vmem_to_hbm [thread:$0]  %s105, 16, %s107, [#allocation6]
    $region33: #{tpu_custom_call.1} parent=1 // pred_fallthru
      _
    // Predicated region
    $region34: #{tpu_custom_call.1} parent=1 // pred_check
      _
    $region35: #{tpu_custom_call.1} parent=1 // pred_check_branch
      %111 = sbr.rel (0) target = $region37
    $region36: #{tpu_custom_call.1} parent=1 // pred_region
      %113 = dma.done [#allocation6], 16
    $region37: #{tpu_custom_call.1} parent=1 // pred_fallthru
      _
    %114 = vsyncpa [#allocation5], 1
    %115 = vsyncpa [#allocation8], 1
    %116 = vsyncpa [#allocation6], 1

</llo_original>
